<compile_context>
chip_gen: v6e
topology: v6e:2x2x1
jax: 0.10.0
libtpu: 0.0.40
codegen_flags: <defaults>
</compile_context>

<pallas_src>
import jax
import jax.numpy as jnp
from jax.experimental import pallas as pl
from jax.experimental.pallas import tpu as pltpu


def _round_up(a: int, b: int) -> int:
    return (a + b - 1) // b * b


def _sublane_multiple(dtype) -> int:
    """Native sublane tile for a dtype: 8 (f32), 16 (bf16), 32 (int8/fp8)."""
    return max(8, 32 // jnp.dtype(dtype).itemsize)


def _vmem_capacity_bytes() -> int:
    try:
        cap = int(pltpu.get_tpu_info().vmem_capacity_bytes)
        if cap > 0:
            return cap
    except Exception:
        pass
    return 64 * 1024 * 1024          # conservative fallback (v7x per-TC size)


def _num_tensorcores() -> int:
    """Best-effort TensorCore count (v7x has 2; v5e/v6e have 1)."""
    try:
        info = pltpu.get_tpu_info()
        for name in ("num_tensorcores", "tensorcore_count", "num_cores",
                     "core_count"):
            v = getattr(info, name, None)
            if isinstance(v, int) and v > 0:
                return v
    except Exception:
        pass
    return 1


def _make_rezero_kernel(n_col: int, tn: int):
    """Build the fused  out = x + alpha * (x @ W + b)  kernel body.

    alpha_ref : SMEM (1, 1)  f32 scalar (the learnable ReZero gate)
    x_ref     : VMEM (tm, D)  activations (residual path keeps input dtype)
    w_ref     : VMEM (D, tn)  weight slab (tn == D when W is resident)
    b_ref     : VMEM (1, tn)  f32 bias slab
    o_ref     : VMEM (tm, tn) output
    """
    def kernel(alpha_ref, x_ref, w_ref, b_ref, o_ref):
        alpha = alpha_ref[0, 0]
        x = x_ref[...]
        # MXU operand cast only if the weights were prepared in a narrower
        # dtype; accumulation is always f32.
        xm = x.astype(w_ref.dtype) if w_ref.dtype != x.dtype else x
        y = jnp.dot(xm, w_ref[...], preferred_element_type=jnp.float32)
        y = y + b_ref[...].astype(jnp.float32)
        if n_col == 1:
            x_res = x                                    # residual: whole tile
        else:
            # Column-tiled (large-D) path: the residual only needs this output
            # slab's columns of x.  tn is a multiple of 128 that divides D, so
            # the lane offset is aligned.
            j = pl.program_id(1)
            x_res = x_ref[:, pl.ds(pl.multiple_of(j * tn, 128), tn)]
        # ReZero residual in f32 (VPU work, hidden under DMA / MXU).
        o_ref[...] = (x_res.astype(jnp.float32) + alpha * y).astype(o_ref.dtype)
    return kernel


def prepare_rezero_linear_params(weight, bias, *, matmul_dtype=None):
    """One-time prep of the wrapped nn.Linear parameters.

    Hoisted out of the forward pass so the per-call hot path does zero
    weight-side HBM traffic (no transpose / cast / reshape per call).

    weight       : (out_features, in_features)  -- PyTorch nn.Linear layout.
    bias         : (out_features,)
    matmul_dtype : optional MXU operand dtype (e.g. jnp.bfloat16).  Default
                   None keeps the original dtype so the forward matches the
                   f32 PyTorch Linear; the bf16 trade-off is opt-in.
    """
    w = jnp.asarray(weight).T                  # (in, out): kernel does x @ W
    if matmul_dtype is not None:
        w = w.astype(matmul_dtype)
    b = jnp.asarray(bias).astype(jnp.float32).reshape(1, -1)
    return {"w": w, "b": b}


def rezero_linear(x, params, alpha, *, tm=1024):
    """Fused ReZero-around-Linear forward:  y = x + alpha * (x @ W + b).

    x      : (..., D) activations (any leading dims; D = embedding dim).
    params : dict from prepare_rezero_linear_params().
    alpha  : scalar (the learnable ReZero gate).
    tm     : max rows per grid step (shrunk automatically to fit VMEM / M).
    """
    w, b = params["w"], params["b"]
    D = x.shape[-1]
    assert w.shape == (D, D) and b.shape == (1, D), (w.shape, b.shape, D)

    orig_shape = x.shape
    M = 1
    for s in orig_shape[:-1]:
        M *= int(s)
    x2 = x.reshape(M, D)

    x_isz = jnp.dtype(x.dtype).itemsize
    w_isz = jnp.dtype(w.dtype).itemsize
    sub = _sublane_multiple(x.dtype)

    vmem_cap = _vmem_capacity_bytes()
    budget = int(vmem_cap * 0.7)               # headroom for compiler temps

    # ---- output-feature (column) tiling: keep W resident when it fits -----
    w_total = D * D * w_isz
    if w_total <= budget // 4 or D % 128 != 0:
        tn, n_col, w_bufs = D, 1, 1            # whole W, VMEM resident
    else:
        # Stream (D, tn) column slabs of W (double-buffered): pick the largest
        # tn that is a multiple of 128, divides D, and keeps two slabs within
        # ~1/4 of the budget.
        tn = 128
        cand = 256
        while cand <= D:
            if D % cand == 0 and 2 * D * cand * w_isz <= budget // 4:
                tn = cand
            cand += 128
        n_col, w_bufs = pl.cdiv(D, tn), 2

    # ---- row tile sized from the remaining VMEM budget ---------------------
    fixed = w_bufs * (D * tn * w_isz + tn * 4)          # W slab(s) + bias
    per_row = (2 * D * x_isz                            # x tile   (2 buffers)
               + 2 * tn * x_isz                         # out tile (2 buffers)
               + (D * w_isz if w.dtype != x.dtype else 0)   # MXU-cast temp
               + 2 * tn * 4)                            # f32 y / residual temps
    tm_cap = max(sub, (budget - fixed) // per_row)
    tm_eff = min(int(tm), tm_cap, _round_up(M, sub))
    tm_eff = max(sub, (tm_eff // sub) * sub)
    if tm_eff >= 512:
        tm_eff = (tm_eff // 256) * 256                  # MXU/DMA friendly
    n_row = pl.cdiv(M, tm_eff)

    # v7x has 2 TensorCores: keep the row-step count a multiple of the core
    # count so the "parallel" axis splits evenly.  Single-core v5e/v6e skip
    # this (the split would only add grid-step overhead there).
    n_tc = _num_tensorcores()
    if 1 < n_tc <= 4 and n_row > 1 and n_row % n_tc:
        n_row_t = _round_up(n_row, n_tc)
        tm_eff = max(sub, _round_up(pl.cdiv(M, n_row_t), sub))
        n_row = pl.cdiv(M, tm_eff)

    # ---- explicit scoped-VMEM limit from the buffer plan (+ headroom) ------
    plan = 2 * (D * tn * w_isz + tn * 4) + tm_eff * per_row
    vmem_limit = min(int(vmem_cap * 0.9),
                     max(32 * 1024 * 1024, int(plan * 1.5) + (2 << 20)))

    alpha_arr = jnp.asarray(alpha, jnp.float32).reshape(1, 1)
    kernel = _make_rezero_kernel(n_col, tn)
    grid = (n_row, n_col)
    compiler_params = pltpu.CompilerParams(
        dimension_semantics=("parallel", "parallel"),
        vmem_limit_bytes=int(vmem_limit))

    def _call(single_buffer_w: bool):
        if single_buffer_w:
            # Constant index_map => W / bias are DMA'd exactly once; the
            # second pipeline buffer would be pure VMEM waste.
            w_spec = pl.BlockSpec((D, tn), lambda i, j: (0, j),
                                  pipeline_mode=pl.Buffered(1))
            b_spec = pl.BlockSpec((1, tn), lambda i, j: (0, j),
                                  pipeline_mode=pl.Buffered(1))
        else:
            w_spec = pl.BlockSpec((D, tn), lambda i, j: (0, j))
            b_spec = pl.BlockSpec((1, tn), lambda i, j: (0, j))
        return pl.pallas_call(
            kernel,
            out_shape=jax.ShapeDtypeStruct((M, D), x.dtype),
            grid=grid,
            in_specs=[
                pl.BlockSpec(memory_space=pltpu.MemorySpace.SMEM),  # alpha
                pl.BlockSpec((tm_eff, D), lambda i, j: (i, 0)),     # x rows
                w_spec,                                             # W
                b_spec,                                             # bias
            ],
            out_specs=pl.BlockSpec((tm_eff, tn), lambda i, j: (i, j)),
            compiler_params=compiler_params,
        )(alpha_arr, x2, w, b)

    if n_col == 1:
        try:
            out = _call(True)           # single-buffered resident W
        except Exception:
            # Fallback if this Pallas build rejects Buffered(1): default
            # double-buffering only costs extra VMEM for the resident W
            # (it is still DMA'd once thanks to the constant index_map).
            out = _call(False)
    else:
        out = _call(False)              # streamed W slabs: keep double-buffer

    return out.reshape(orig_shape)


def _reference(x, w_torch, b_torch, alpha):
    # PyTorch: x + alpha * F.linear(x, W, b),  W in (out, in) layout.
    return x + alpha * (jnp.einsum("...d,ed->...e", x, w_torch) + b_torch)


if __name__ == "__main__":
    key = jax.random.PRNGKey(0)
    alpha = jnp.float32(0.001)          # nn.Parameter(torch.tensor(0.001))

    ok = True
    # Small shapes: a tiny non-128-aligned embed, and the module docstring's
    # (1, 10, 256) (ragged row count + lane-aligned embed).
    for (B, S, D) in [(2, 8, 32), (1, 10, 256)]:
        key, kx, kw, kb = jax.random.split(key, 4)
        x = jax.random.normal(kx, (B, S, D), dtype=jnp.float32)
        # PyTorch nn.Linear weight layout is (out_features, in_features).
        w_torch = jax.random.normal(kw, (D, D), dtype=jnp.float32) * 0.05
        b_torch = jax.random.normal(kb, (D,), dtype=jnp.float32) * 0.05

        # One-time parameter prep (hoisted out of the forward hot path).
        params = prepare_rezero_linear_params(w_torch, b_torch)

        y = jax.block_until_ready(rezero_linear(x, params, alpha))
        y_ref = _reference(x, w_torch, b_torch, alpha)

        if not jnp.allclose(y, y_ref, atol=1e-4, rtol=1e-4):
            ok = False
            print(f"MISMATCH at {(B, S, D)}: max abs err = "
                  f"{float(jnp.max(jnp.abs(y - y_ref)))}")

    if ok:
        print("KERNEL_OK")
</pallas_src>

<mosaic_0001>
module attributes {stable_mosaic.version = 11 : i64} {
  func.func @kernel(%arg0: i32, %arg1: i32, %arg2: memref<1x1xf32, #tpu.memory_space<smem>>, %arg3: memref<16x32xf32, #tpu.memory_space<vmem>>, %arg4: memref<32x32xf32, #tpu.memory_space<vmem>>, %arg5: memref<1x32xf32, #tpu.memory_space<vmem>>, %arg6: memref<16x32xf32, #tpu.memory_space<vmem>>) attributes {dimension_semantics = [#tpu.dimension_semantics<parallel>, #tpu.dimension_semantics<parallel>], iteration_bounds = array<i64: 1, 1>, scalar_prefetch = 0 : i64, scratch_operands = 0 : i64, tpu.core_type = #tpu.core_type<tc>, window_params = [{transform_indices = @transform_0, window_bounds = array<i64: 1, 1>}, {transform_indices = @transform_1, window_bounds = array<i64: 16, 32>}, {pipeline_mode = #tpu.pipeline_mode<synchronous>, transform_indices = @transform_2, window_bounds = array<i64: 32, 32>}, {pipeline_mode = #tpu.pipeline_mode<synchronous>, transform_indices = @transform_3, window_bounds = array<i64: 1, 32>}, {transform_indices = @transform_4, window_bounds = array<i64: 16, 32>}]} {
    %c0 = arith.constant 0 : index
    %c0_0 = arith.constant 0 : index
    %0 = memref.load %arg2[%c0, %c0_0] : memref<1x1xf32, #tpu.memory_space<smem>>
    %c0_1 = arith.constant 0 : index
    %c0_2 = arith.constant 0 : index
    %1 = vector.load %arg3[%c0_1, %c0_2] : memref<16x32xf32, #tpu.memory_space<vmem>>, vector<16x32xf32>
    %c0_3 = arith.constant 0 : index
    %c0_4 = arith.constant 0 : index
    %2 = vector.load %arg4[%c0_3, %c0_4] : memref<32x32xf32, #tpu.memory_space<vmem>>, vector<32x32xf32>
    %cst = arith.constant dense<0.000000e+00> : vector<16x32xf32>
    %3 = tpu.matmul %1, %2, %cst {dimension_numbers = #tpu.dot_dimension_numbers<[1], [0], [0], [1], [0, 0, 1, 1], [], []>} : vector<16x32xf32>, vector<32x32xf32>, vector<16x32xf32> -> vector<16x32xf32>
    %c0_5 = arith.constant 0 : index
    %c0_6 = arith.constant 0 : index
    %4 = vector.load %arg5[%c0_5, %c0_6] : memref<1x32xf32, #tpu.memory_space<vmem>>, vector<1x32xf32>
    %5 = vector.broadcast %4 : vector<1x32xf32> to vector<16x32xf32>
    %6 = arith.addf %3, %5 : vector<16x32xf32>
    %7 = vector.broadcast %0 : f32 to vector<16x32xf32>
    %8 = arith.mulf %7, %6 : vector<16x32xf32>
    %9 = arith.addf %1, %8 : vector<16x32xf32>
    %c0_7 = arith.constant 0 : index
    %c0_8 = arith.constant 0 : index
    %10 = vector.load %arg6[%c0_7, %c0_8] : memref<16x32xf32, #tpu.memory_space<vmem>>, vector<16x32xf32>
    tpu.vector_store %arg6[%c0_7, %c0_8], %9 {strides = array<i32>} : memref<16x32xf32, #tpu.memory_space<vmem>>, vector<16x32xf32>,
    return
  }
  func.func @transform_0(%arg0: i32, %arg1: i32) -> (i32, i32) {
    %c0_i32 = arith.constant 0 : i32
    %c0_i32_0 = arith.constant 0 : i32
    %c0_i32_1 = arith.constant 0 : i32
    return %c0_i32, %c0_i32_0 : i32, i32
  }
  func.func @transform_1(%arg0: i32, %arg1: i32) -> (i32, i32) {
    %c0_i32 = arith.constant 0 : i32
    %c0_i32_0 = arith.constant 0 : i32
    return %arg0, %c0_i32 : i32, i32
  }
  func.func @transform_2(%arg0: i32, %arg1: i32) -> (i32, i32) {
    %c0_i32 = arith.constant 0 : i32
    %c0_i32_0 = arith.constant 0 : i32
    return %c0_i32, %arg1 : i32, i32
  }
  func.func @transform_3(%arg0: i32, %arg1: i32) -> (i32, i32) {
    %c0_i32 = arith.constant 0 : i32
    %c0_i32_0 = arith.constant 0 : i32
    return %c0_i32, %arg1 : i32, i32
  }
  func.func @transform_4(%arg0: i32, %arg1: i32) -> (i32, i32) {
    %c0_i32 = arith.constant 0 : i32
    return %arg0, %arg1 : i32, i32
  }
}

module attributes {stable_mosaic.version = 11 : i64} {
  func.func @kernel(%arg0: i32, %arg1: i32, %arg2: memref<1x1xf32, #tpu.memory_space<smem>>, %arg3: memref<16x32xf32, #tpu.memory_space<vmem>>, %arg4: memref<32x32xf32, #tpu.memory_space<vmem>>, %arg5: memref<1x32xf32, #tpu.memory_space<vmem>>, %arg6: memref<16x32xf32, #tpu.memory_space<vmem>>) attributes {dimension_semantics = [#tpu.dimension_semantics<parallel>, #tpu.dimension_semantics<parallel>], iteration_bounds = array<i64: 1, 1>, scalar_prefetch = 0 : i64, scratch_operands = 0 : i64, tpu.core_type = #tpu.core_type<tc>, window_params = [{transform_indices = @transform_0, window_bounds = array<i64: 1, 1>}, {transform_indices = @transform_1, window_bounds = array<i64: 16, 32>}, {transform_indices = @transform_2, window_bounds = array<i64: 32, 32>}, {transform_indices = @transform_3, window_bounds = array<i64: 1, 32>}, {transform_indices = @transform_4, window_bounds = array<i64: 16, 32>}]} {
    %c0 = arith.constant 0 : index
    %c0_0 = arith.constant 0 : index
    %0 = memref.load %arg2[%c0, %c0_0] : memref<1x1xf32, #tpu.memory_space<smem>>
    %c0_1 = arith.constant 0 : index
    %c0_2 = arith.constant 0 : index
    %1 = vector.load %arg3[%c0_1, %c0_2] : memref<16x32xf32, #tpu.memory_space<vmem>>, vector<16x32xf32>
    %c0_3 = arith.constant 0 : index
    %c0_4 = arith.constant 0 : index
    %2 = vector.load %arg4[%c0_3, %c0_4] : memref<32x32xf32, #tpu.memory_space<vmem>>, vector<32x32xf32>
    %cst = arith.constant dense<0.000000e+00> : vector<16x32xf32>
    %3 = tpu.matmul %1, %2, %cst {dimension_numbers = #tpu.dot_dimension_numbers<[1], [0], [0], [1], [0, 0, 1, 1], [], []>} : vector<16x32xf32>, vector<32x32xf32>, vector<16x32xf32> -> vector<16x32xf32>
    %c0_5 = arith.constant 0 : index
    %c0_6 = arith.constant 0 : index
    %4 = vector.load %arg5[%c0_5, %c0_6] : memref<1x32xf32, #tpu.memory_space<vmem>>, vector<1x32xf32>
    %5 = vector.broadcast %4 : vector<1x32xf32> to vector<16x32xf32>
    %6 = arith.addf %3, %5 : vector<16x32xf32>
    %7 = vector.broadcast %0 : f32 to vector<16x32xf32>
    %8 = arith.mulf %7, %6 : vector<16x32xf32>
    %9 = arith.addf %1, %8 : vector<16x32xf32>
    %c0_7 = arith.constant 0 : index
    %c0_8 = arith.constant 0 : index
    %10 = vector.load %arg6[%c0_7, %c0_8] : memref<16x32xf32, #tpu.memory_space<vmem>>, vector<16x32xf32>
    tpu.vector_store %arg6[%c0_7, %c0_8], %9 {strides = array<i32>} : memref<16x32xf32, #tpu.memory_space<vmem>>, vector<16x32xf32>,
    return
  }
  func.func @transform_0(%arg0: i32, %arg1: i32) -> (i32, i32) {
    %c0_i32 = arith.constant 0 : i32
    %c0_i32_0 = arith.constant 0 : i32
    %c0_i32_1 = arith.constant 0 : i32
    return %c0_i32, %c0_i32_0 : i32, i32
  }
  func.func @transform_1(%arg0: i32, %arg1: i32) -> (i32, i32) {
    %c0_i32 = arith.constant 0 : i32
    %c0_i32_0 = arith.constant 0 : i32
    return %arg0, %c0_i32 : i32, i32
  }
  func.func @transform_2(%arg0: i32, %arg1: i32) -> (i32, i32) {
    %c0_i32 = arith.constant 0 : i32
    %c0_i32_0 = arith.constant 0 : i32
    return %c0_i32, %arg1 : i32, i32
  }
  func.func @transform_3(%arg0: i32, %arg1: i32) -> (i32, i32) {
    %c0_i32 = arith.constant 0 : i32
    %c0_i32_0 = arith.constant 0 : i32
    return %c0_i32, %arg1 : i32, i32
  }
  func.func @transform_4(%arg0: i32, %arg1: i32) -> (i32, i32) {
    %c0_i32 = arith.constant 0 : i32
    return %arg0, %arg1 : i32, i32
  }
}

</mosaic_0001>

<llo_original>
// kernel: tpu_custom_call.1
$region0: #{tpu_custom_call.1}
  #allocation0 [shape = 'u32[]', space=smem, size = 0x4, offset = 0x4, fixed_abs, tag = 'smem constant byte address 0x4 - core index']
  #allocation1 [shape = 'u32[144,128]{1,0:T(1,128)}', space=vmem, size = 0x12000, scoped, tag = 'internal scratch']
  #allocation2 [shape = 'f32[1,1]{1,0:T(1,128)S(6)}', space=smem, size = 0x200, scoped, tag = 'scoped memory for tpu_custom_call.1']
  %s0 = inlined_call_operand.<no memory space> [shape: f32[1,1], index: 0, kind: input, shape index: {}]
  %s1 = inlined_call_operand.hbm [shape: f32[16,32], index: 1, kind: input, shape index: {}]
  %s2 = inlined_call_operand.hbm [shape: f32[32,32], index: 2, kind: input, shape index: {}]
  %s3 = inlined_call_operand.vmem [shape: f32[1,32], index: 3, kind: input, shape index: {}]
  %s4 = inlined_call_operand.hbm [shape: f32[16,32], index: 4, kind: output, shape index: {}]
  %s5 = sld [smem:[#allocation0]]
  $region34: #{tpu_custom_call.1} parent=0
    _
  %s7 = ssub.s32 1, %s5
  %s8 = scalar_select 0, %s7, %s5
  %9 = sst [smem:[#allocation2]] %s0
  $region1: #{tpu_custom_call.1} parent=0
    #allocation3 [shape = 'u8[8192]{0}', space=vmem, size = 0x2000, scoped, tag = 'input window, operand 1, single buffered']
    #allocation4 [shape = 's32[1]{0}', space=sflag, size = 0x4, scoped, tag = 'scoped memory for tpu_custom_call.1']
    #allocation5 [shape = 's32[1]{0}', space=sflag, size = 0x4, scoped, tag = 'scoped memory for tpu_custom_call.1']
    #allocation6 [shape = 'u8[16384]{0}', space=vmem, size = 0x4000, scoped, tag = 'input window, operand 2, single buffered']
    #allocation7 [shape = 's32[1]{0}', space=sflag, size = 0x4, scoped, tag = 'scoped memory for tpu_custom_call.1']
    #allocation8 [shape = 'u8[8192]{0}', space=vmem, size = 0x2000, scoped, tag = 'output window, operand 0, single buffered']
    %10 = vsyncpa [#allocation4], 0
    %11 = vsyncpa [#allocation7], 0
    %12 = vsyncpa [#allocation5], 0
    // Predicated region
    $region2: #{tpu_custom_call.1} parent=1 // pred_check
      _
    $region3: #{tpu_custom_call.1} parent=1 // pred_check_branch
      %14 = sbr.rel (0) target = $region5
    $region4: #{tpu_custom_call.1} parent=1 // pred_region
      _
    $region5: #{tpu_custom_call.1} parent=1 // pred_fallthru
      _
    // Predicated region
    $region6: #{tpu_custom_call.1} parent=1 // pred_check
      _
    $region7: #{tpu_custom_call.1} parent=1 // pred_check_branch
      %16 = sbr.rel (0) target = $region9
    $region8: #{tpu_custom_call.1} parent=1 // pred_region
      %s18 = ssub.s32 256, 256
      %19 = vsyncadd [#allocation4], %s18
      %s20 = sshll.u32 [#allocation3], 4
      %s21 = int_to_ptr.vmem [resolvable:$true] %s20
      %26 = dma.hbm_to_vmem [thread:$0]  %s1, 256, %s21, [#allocation4], 128, 128, 8
    $region9: #{tpu_custom_call.1} parent=1 // pred_fallthru
      _
    // Predicated region
    $region10: #{tpu_custom_call.1} parent=1 // pred_check
      _
    $region11: #{tpu_custom_call.1} parent=1 // pred_check_branch
      %28 = sbr.rel (0) target = $region13
    $region12: #{tpu_custom_call.1} parent=1 // pred_region
      %s30 = ssub.s32 512, 512
      %31 = vsyncadd [#allocation7], %s30
      %s32 = sshll.u32 [#allocation6], 4
      %s33 = int_to_ptr.vmem [resolvable:$true] %s32
      %38 = dma.hbm_to_vmem [thread:$0]  %s2, 512, %s33, [#allocation7], 128, 128, 8
    $region13: #{tpu_custom_call.1} parent=1 // pred_fallthru
      _
    // Predicated region
    $region14: #{tpu_custom_call.1} parent=1 // pred_check
      _
    $region15: #{tpu_custom_call.1} parent=1 // pred_check_branch
      %40 = sbr.rel (0) target = $region17
    $region16: #{tpu_custom_call.1} parent=1 // pred_region
      _
    $region17: #{tpu_custom_call.1} parent=1 // pred_fallthru
      _
    // Predicated region
    $region18: #{tpu_custom_call.1} parent=1 // pred_check
      _
    $region19: #{tpu_custom_call.1} parent=1 // pred_check_branch
      %42 = sbr.rel (0) target = $region21
    $region20: #{tpu_custom_call.1} parent=1 // pred_region
      %43 = dma.done [#allocation4], 256
    $region21: #{tpu_custom_call.1} parent=1 // pred_fallthru
      _
    // Predicated region
    $region22: #{tpu_custom_call.1} parent=1 // pred_check
      _
    $region23: #{tpu_custom_call.1} parent=1 // pred_check_branch
      %45 = sbr.rel (0) target = $region25
    $region24: #{tpu_custom_call.1} parent=1 // pred_region
      %46 = dma.done [#allocation7], 512
    $region25: #{tpu_custom_call.1} parent=1 // pred_fallthru
      _
    %s47 = sld [smem:[#allocation2]]
    %v48 = vld [vmem:[#allocation3] sm:$0xff]
    %v49 = vld [vmem:[#allocation3 + $0x8] sm:$0xff]
    %v50 = vld [vmem:[#allocation6] sm:$0xff]
    %v51 = vld [vmem:[#allocation6 + $0x8] sm:$0xff]
    %v52 = vld [vmem:[#allocation6 + $0x10] sm:$0xff]
    %v53 = vld [vmem:[#allocation6 + $0x18] sm:$0xff]
    %v54 = vld [vmem:[%s3] sm:$0x1]
    %v56 = vlaneseq
    %v57 = vshrl.u32 %v56, 7
    %v58 = vsub.s32 0, %v57
    %v59 = vrot.slane %v54, %v58
    %vm61 = vcmask 261120
    %v63 = vsel %vm61, %v48, 0
    %v66 = vsel %vm61, %v49, 0
    %68 = vmatprep.subr.mxu0 0.0
    %69 = vmatpush1.msra.mxu0 0.0
    %70 = vmatprep.subr.mxu0 0.0
    %71 = vmatpush1.msra.mxu0 0.0
    %72 = vmatprep.subr.mxu0 0.0
    %73 = vmatpush1.msra.mxu0 0.0
    %74 = vmatprep.subr.mxu0 0.0
    %75 = vmatpush1.msra.mxu0 0.0
    %76 = vmatprep.subr.mxu0 0.0
    %77 = vmatpush1.msra.mxu0 0.0
    %78 = vmatprep.subr.mxu0 0.0
    %79 = vmatpush1.msra.mxu0 0.0
    %80 = vmatprep.subr.mxu0 0.0
    %81 = vmatpush1.msra.mxu0 0.0
    %82 = vmatprep.subr.mxu0 0.0
    %83 = vmatpush1.msra.mxu0 0.0
    %84 = vmatprep.subr.mxu0 0.0
    %85 = vmatpush1.msra.mxu0 0.0
    %86 = vmatprep.subr.mxu0 0.0
    %87 = vmatpush1.msra.mxu0 0.0
    %88 = vmatprep.subr.mxu0 0.0
    %89 = vmatpush1.msra.mxu0 0.0
    %90 = vmatprep.subr.mxu0 0.0
    %91 = vmatpush1.msra.mxu0 0.0
    %92 = vmatprep.subr.mxu0 0.0
    %93 = vmatpush1.msra.mxu0 %v53
    %94 = vmatprep.subr.mxu0 0.0
    %95 = vmatpush1.msra.mxu0 %v52
    %96 = vmatprep.subr.mxu0 0.0
    %97 = vmatpush1.msra.mxu0 %v51
    %98 = vmatprep.subr.mxu0 0.0
    %99 = vmatpush1.msra.mxu0 %v50
    %100 = vmatprep.subr.mxu0 0.0
    %101 = vmatpush2.msra.mxu0 0.0
    %102 = vmatprep.subr.mxu0 0.0
    %103 = vmatpush2.msra.mxu0 0.0
    %104 = vmatprep.subr.mxu0 0.0
    %105 = vmatpush2.msra.mxu0 0.0
    %106 = vmatprep.subr.mxu0 0.0
    %107 = vmatpush2.msra.mxu0 0.0
    %108 = vmatprep.subr.mxu0 0.0
    %109 = vmatpush2.msra.mxu0 0.0
    %110 = vmatprep.subr.mxu0 0.0
    %111 = vmatpush2.msra.mxu0 0.0
    %112 = vmatprep.subr.mxu0 0.0
    %113 = vmatpush2.msra.mxu0 0.0
    %114 = vmatprep.subr.mxu0 0.0
    %115 = vmatpush2.msra.mxu0 0.0
    %116 = vmatprep.subr.mxu0 0.0
    %117 = vmatpush2.msra.mxu0 0.0
    %118 = vmatprep.subr.mxu0 0.0
    %119 = vmatpush2.msra.mxu0 0.0
    %120 = vmatprep.subr.mxu0 0.0
    %121 = vmatpush2.msra.mxu0 0.0
    %122 = vmatprep.subr.mxu0 0.0
    %123 = vmatpush2.msra.mxu0 0.0
    %124 = vmatprep.subr.mxu0 0.0
    %125 = vmatpush2.msra.mxu0 0.0
    %126 = vmatprep.subr.mxu0 0.0
    %127 = vmatpush2.msra.mxu0 0.0
    %128 = vmatprep.subr.mxu0 0.0
    %129 = vmatpush2.msra.mxu0 0.0
    %130 = vmatprep.subr.mxu0 0.0
    %131 = vmatpush2.msra.mxu0 0.0
    %132 = vmatprep.mubr.f32.mxu0 0.0
    %133 = vmatmul.mubr.f32.gmra.mxu0 %v63
    %v134 = vpop.f32.mrf.mxu0
    %v135 = vadd.f32 %v59, %v134
    %v136 = vpop.f32.mrf.mxu0
    %137 = vmatprep.mubr.f32.mxu0 0.0
    %138 = vmatmul.mubr.f32.gmra.mxu0 %v66
    %v139 = vpop.f32.mrf.mxu0
    %v140 = vadd.f32 %v59, %v139
    %v141 = vpop.f32.mrf.mxu0
    %142 = vdwg.mxu0
    %v143 = vstv %s47
    %v144 = vmul.f32 %v143, %v135
    %v145 = vmul.f32 %v143, %v140
    %v146 = vadd.f32 %v48, %v144
    %v147 = vadd.f32 %v49, %v145
    %148 = vst.msk [vmem:[#allocation8] sm:$0xff] %vm61, %v146
    %149 = vst.msk [vmem:[#allocation8 + $0x8] sm:$0xff] %vm61, %v147
    // Predicated region
    $region26: #{tpu_custom_call.1} parent=1 // pred_check
      _
    $region27: #{tpu_custom_call.1} parent=1 // pred_check_branch
      %151 = sbr.rel (0) target = $region29
    $region28: #{tpu_custom_call.1} parent=1 // pred_region
      %s153 = ssub.s32 256, 256
      %154 = vsyncadd [#allocation5], %s153
      %s155 = sshll.u32 [#allocation8], 4
      %s156 = int_to_ptr.vmem [resolvable:$true] %s155
      %161 = dma.vmem_to_hbm [thread:$0]  %s156, 256, %s4, [#allocation5], 128, 128, 8
    $region29: #{tpu_custom_call.1} parent=1 // pred_fallthru
      _
    // Predicated region
    $region30: #{tpu_custom_call.1} parent=1 // pred_check
      _
    $region31: #{tpu_custom_call.1} parent=1 // pred_check_branch
      %163 = sbr.rel (0) target = $region33
    $region32: #{tpu_custom_call.1} parent=1 // pred_region
      %164 = dma.done [#allocation5], 256
    $region33: #{tpu_custom_call.1} parent=1 // pred_fallthru
      _
    %165 = vsyncpa [#allocation4], 1
    %166 = vsyncpa [#allocation7], 1
    %167 = vsyncpa [#allocation5], 1

// kernel: tpu_custom_call.1
$region0: #{tpu_custom_call.1}
  #allocation0 [shape = 'u32[]', space=smem, size = 0x4, offset = 0x4, fixed_abs, tag = 'smem constant byte address 0x4 - core index']
  #allocation1 [shape = 'u32[144,128]{1,0:T(1,128)}', space=vmem, size = 0x12000, scoped, tag = 'internal scratch']
  #allocation2 [shape = 'f32[1,1]{1,0:T(1,128)S(6)}', space=smem, size = 0x200, scoped, tag = 'scoped memory for tpu_custom_call.1']
  %s0 = inlined_call_operand.<no memory space> [shape: f32[1,1], index: 0, kind: input, shape index: {}]
  %s1 = inlined_call_operand.hbm [shape: f32[16,32], index: 1, kind: input, shape index: {}]
  %s2 = inlined_call_operand.hbm [shape: f32[32,32], index: 2, kind: input, shape index: {}]
  %s3 = inlined_call_operand.vmem [shape: f32[1,32], index: 3, kind: input, shape index: {}]
  %s4 = inlined_call_operand.hbm [shape: f32[16,32], index: 4, kind: output, shape index: {}]
  %s5 = sld [smem:[#allocation0]]
  $region34: #{tpu_custom_call.1} parent=0
    _
  %s7 = ssub.s32 1, %s5
  %s8 = scalar_select 0, %s7, %s5
  %9 = sst [smem:[#allocation2]] %s0
  $region1: #{tpu_custom_call.1} parent=0
    #allocation3 [shape = 'u8[8192]{0}', space=vmem, size = 0x2000, scoped, tag = 'input window, operand 1, single buffered']
    #allocation4 [shape = 's32[1]{0}', space=sflag, size = 0x4, scoped, tag = 'scoped memory for tpu_custom_call.1']
    #allocation5 [shape = 's32[1]{0}', space=sflag, size = 0x4, scoped, tag = 'scoped memory for tpu_custom_call.1']
    #allocation6 [shape = 'u8[16384]{0}', space=vmem, size = 0x4000, scoped, tag = 'input window, operand 2, single buffered']
    #allocation7 [shape = 's32[1]{0}', space=sflag, size = 0x4, scoped, tag = 'scoped memory for tpu_custom_call.1']
    #allocation8 [shape = 'u8[8192]{0}', space=vmem, size = 0x2000, scoped, tag = 'output window, operand 0, single buffered']
    %10 = vsyncpa [#allocation4], 0
    %11 = vsyncpa [#allocation7], 0
    %12 = vsyncpa [#allocation5], 0
    // Predicated region
    $region2: #{tpu_custom_call.1} parent=1 // pred_check
      _
    $region3: #{tpu_custom_call.1} parent=1 // pred_check_branch
      %14 = sbr.rel (0) target = $region5
    $region4: #{tpu_custom_call.1} parent=1 // pred_region
      _
    $region5: #{tpu_custom_call.1} parent=1 // pred_fallthru
      _
    // Predicated region
    $region6: #{tpu_custom_call.1} parent=1 // pred_check
      _
    $region7: #{tpu_custom_call.1} parent=1 // pred_check_branch
      %16 = sbr.rel (0) target = $region9
    $region8: #{tpu_custom_call.1} parent=1 // pred_region
      %s18 = ssub.s32 256, 256
      %19 = vsyncadd [#allocation4], %s18
      %s20 = sshll.u32 [#allocation3], 4
      %s21 = int_to_ptr.vmem [resolvable:$true] %s20
      %26 = dma.hbm_to_vmem [thread:$0]  %s1, 256, %s21, [#allocation4], 128, 128, 8
    $region9: #{tpu_custom_call.1} parent=1 // pred_fallthru
      _
    // Predicated region
    $region10: #{tpu_custom_call.1} parent=1 // pred_check
      _
    $region11: #{tpu_custom_call.1} parent=1 // pred_check_branch
      %28 = sbr.rel (0) target = $region13
    $region12: #{tpu_custom_call.1} parent=1 // pred_region
      %s30 = ssub.s32 512, 512
      %31 = vsyncadd [#allocation7], %s30
      %s32 = sshll.u32 [#allocation6], 4
      %s33 = int_to_ptr.vmem [resolvable:$true] %s32
      %38 = dma.hbm_to_vmem [thread:$0]  %s2, 512, %s33, [#allocation7], 128, 128, 8
    $region13: #{tpu_custom_call.1} parent=1 // pred_fallthru
      _
    // Predicated region
    $region14: #{tpu_custom_call.1} parent=1 // pred_check
      _
    $region15: #{tpu_custom_call.1} parent=1 // pred_check_branch
      %40 = sbr.rel (0) target = $region17
    $region16: #{tpu_custom_call.1} parent=1 // pred_region
      _
    $region17: #{tpu_custom_call.1} parent=1 // pred_fallthru
      _
    // Predicated region
    $region18: #{tpu_custom_call.1} parent=1 // pred_check
      _
    $region19: #{tpu_custom_call.1} parent=1 // pred_check_branch
      %42 = sbr.rel (0) target = $region21
    $region20: #{tpu_custom_call.1} parent=1 // pred_region
      %43 = dma.done [#allocation4], 256
    $region21: #{tpu_custom_call.1} parent=1 // pred_fallthru
      _
    // Predicated region
    $region22: #{tpu_custom_call.1} parent=1 // pred_check
      _
    $region23: #{tpu_custom_call.1} parent=1 // pred_check_branch
      %45 = sbr.rel (0) target = $region25
    $region24: #{tpu_custom_call.1} parent=1 // pred_region
      %46 = dma.done [#allocation7], 512
    $region25: #{tpu_custom_call.1} parent=1 // pred_fallthru
      _
    %s47 = sld [smem:[#allocation2]]
    %v48 = vld [vmem:[#allocation3] sm:$0xff]
    %v49 = vld [vmem:[#allocation3 + $0x8] sm:$0xff]
    %v50 = vld [vmem:[#allocation6] sm:$0xff]
    %v51 = vld [vmem:[#allocation6 + $0x8] sm:$0xff]
    %v52 = vld [vmem:[#allocation6 + $0x10] sm:$0xff]
    %v53 = vld [vmem:[#allocation6 + $0x18] sm:$0xff]
    %v54 = vld [vmem:[%s3] sm:$0x1]
    %v56 = vlaneseq
    %v57 = vshrl.u32 %v56, 7
    %v58 = vsub.s32 0, %v57
    %v59 = vrot.slane %v54, %v58
    %vm61 = vcmask 261120
    %v63 = vsel %vm61, %v48, 0
    %v66 = vsel %vm61, %v49, 0
    %68 = vmatprep.subr.mxu0 0.0
    %69 = vmatpush1.msra.mxu0 0.0
    %70 = vmatprep.subr.mxu0 0.0
    %71 = vmatpush1.msra.mxu0 0.0
    %72 = vmatprep.subr.mxu0 0.0
    %73 = vmatpush1.msra.mxu0 0.0
    %74 = vmatprep.subr.mxu0 0.0
    %75 = vmatpush1.msra.mxu0 0.0
    %76 = vmatprep.subr.mxu0 0.0
    %77 = vmatpush1.msra.mxu0 0.0
    %78 = vmatprep.subr.mxu0 0.0
    %79 = vmatpush1.msra.mxu0 0.0
    %80 = vmatprep.subr.mxu0 0.0
    %81 = vmatpush1.msra.mxu0 0.0
    %82 = vmatprep.subr.mxu0 0.0
    %83 = vmatpush1.msra.mxu0 0.0
    %84 = vmatprep.subr.mxu0 0.0
    %85 = vmatpush1.msra.mxu0 0.0
    %86 = vmatprep.subr.mxu0 0.0
    %87 = vmatpush1.msra.mxu0 0.0
    %88 = vmatprep.subr.mxu0 0.0
    %89 = vmatpush1.msra.mxu0 0.0
    %90 = vmatprep.subr.mxu0 0.0
    %91 = vmatpush1.msra.mxu0 0.0
    %92 = vmatprep.subr.mxu0 0.0
    %93 = vmatpush1.msra.mxu0 %v53
    %94 = vmatprep.subr.mxu0 0.0
    %95 = vmatpush1.msra.mxu0 %v52
    %96 = vmatprep.subr.mxu0 0.0
    %97 = vmatpush1.msra.mxu0 %v51
    %98 = vmatprep.subr.mxu0 0.0
    %99 = vmatpush1.msra.mxu0 %v50
    %100 = vmatprep.subr.mxu0 0.0
    %101 = vmatpush2.msra.mxu0 0.0
    %102 = vmatprep.subr.mxu0 0.0
    %103 = vmatpush2.msra.mxu0 0.0
    %104 = vmatprep.subr.mxu0 0.0
    %105 = vmatpush2.msra.mxu0 0.0
    %106 = vmatprep.subr.mxu0 0.0
    %107 = vmatpush2.msra.mxu0 0.0
    %108 = vmatprep.subr.mxu0 0.0
    %109 = vmatpush2.msra.mxu0 0.0
    %110 = vmatprep.subr.mxu0 0.0
    %111 = vmatpush2.msra.mxu0 0.0
    %112 = vmatprep.subr.mxu0 0.0
    %113 = vmatpush2.msra.mxu0 0.0
    %114 = vmatprep.subr.mxu0 0.0
    %115 = vmatpush2.msra.mxu0 0.0
    %116 = vmatprep.subr.mxu0 0.0
    %117 = vmatpush2.msra.mxu0 0.0
    %118 = vmatprep.subr.mxu0 0.0
    %119 = vmatpush2.msra.mxu0 0.0
    %120 = vmatprep.subr.mxu0 0.0
    %121 = vmatpush2.msra.mxu0 0.0
    %122 = vmatprep.subr.mxu0 0.0
    %123 = vmatpush2.msra.mxu0 0.0
    %124 = vmatprep.subr.mxu0 0.0
    %125 = vmatpush2.msra.mxu0 0.0
    %126 = vmatprep.subr.mxu0 0.0
    %127 = vmatpush2.msra.mxu0 0.0
    %128 = vmatprep.subr.mxu0 0.0
    %129 = vmatpush2.msra.mxu0 0.0
    %130 = vmatprep.subr.mxu0 0.0
    %131 = vmatpush2.msra.mxu0 0.0
    %132 = vmatprep.mubr.f32.mxu0 0.0
    %133 = vmatmul.mubr.f32.gmra.mxu0 %v63
    %v134 = vpop.f32.mrf.mxu0
    %v135 = vadd.f32 %v59, %v134
    %v136 = vpop.f32.mrf.mxu0
    %137 = vmatprep.mubr.f32.mxu0 0.0
    %138 = vmatmul.mubr.f32.gmra.mxu0 %v66
    %v139 = vpop.f32.mrf.mxu0
    %v140 = vadd.f32 %v59, %v139
    %v141 = vpop.f32.mrf.mxu0
    %142 = vdwg.mxu0
    %v143 = vstv %s47
    %v144 = vmul.f32 %v143, %v135
    %v145 = vmul.f32 %v143, %v140
    %v146 = vadd.f32 %v48, %v144
    %v147 = vadd.f32 %v49, %v145
    %148 = vst.msk [vmem:[#allocation8] sm:$0xff] %vm61, %v146
    %149 = vst.msk [vmem:[#allocation8 + $0x8] sm:$0xff] %vm61, %v147
    // Predicated region
    $region26: #{tpu_custom_call.1} parent=1 // pred_check
      _
    $region27: #{tpu_custom_call.1} parent=1 // pred_check_branch
      %151 = sbr.rel (0) target = $region29
    $region28: #{tpu_custom_call.1} parent=1 // pred_region
      %s153 = ssub.s32 256, 256
      %154 = vsyncadd [#allocation5], %s153
      %s155 = sshll.u32 [#allocation8], 4
      %s156 = int_to_ptr.vmem [resolvable:$true] %s155
      %161 = dma.vmem_to_hbm [thread:$0]  %s156, 256, %s4, [#allocation5], 128, 128, 8
    $region29: #{tpu_custom_call.1} parent=1 // pred_fallthru
      _
    // Predicated region
    $region30: #{tpu_custom_call.1} parent=1 // pred_check
      _
    $region31: #{tpu_custom_call.1} parent=1 // pred_check_branch
      %163 = sbr.rel (0) target = $region33
    $region32: #{tpu_custom_call.1} parent=1 // pred_region
      %164 = dma.done [#allocation5], 256
    $region33: #{tpu_custom_call.1} parent=1 // pred_fallthru
      _
    %165 = vsyncpa [#allocation4], 1
    %166 = vsyncpa [#allocation7], 1
    %167 = vsyncpa [#allocation5], 1

</llo_original>
